<compile_context>
chip_gen: v5e
topology: v5e:2x2
jax: 0.10.0
libtpu: 0.0.40
codegen_flags: <defaults>
</compile_context>

<pallas_src>
import jax
import jax.numpy as jnp
import numpy as np
from jax.experimental import pallas as pl
from jax.experimental.pallas import tpu as pltpu


def _round_up(x, m):
    return (x + m - 1) // m * m


def _cdiv(a, b):
    return (a + b - 1) // b


def _vmem_budget_bytes():
    """Per-core VMEM budget: 85% of physical capacity (128 MiB on v5e/v6e, 64 MiB on
    v7x). Falls back to a v7x-safe 64 MiB if the hardware query is unavailable."""
    try:
        cap = int(pltpu.get_tpu_info().vmem_capacity_bytes)
    except Exception:
        cap = 64 << 20
    return int(cap * 0.85)


# ---------------------------------------------------------------------------------
# Kernels
# ---------------------------------------------------------------------------------

def _resmlp_resident_kernel(x_ref, w_ref, b_ref, o_ref, h_ref):
    """Whole-stack-resident path.  grid = (batch_tiles,).

    x_ref: (Bt, Hp) f32                 o_ref: (Bt, Hp) f32
    w_ref: (2*nb+1, Hp, Hp) bf16  packed [w1_0, w2_0, w1_1, w2_1, ..., wf]  (1 VMEM copy)
    b_ref: (2*nb+1, Hp)     f32   packed [b1_0, b2_0, ...,            bf]  (1 VMEM copy)
    h_ref: (Bt, Hp) f32 scratch  -- running activation
    """
    nsteps = w_ref.shape[0]
    nb = (nsteps - 1) // 2
    h_ref[...] = x_ref[...]

    def block(k, carry):
        h = h_ref[...]
        t = jnp.dot(h.astype(jnp.bfloat16), w_ref[2 * k],
                    preferred_element_type=jnp.float32) + b_ref[pl.ds(2 * k, 1), :]
        t = jnp.maximum(t, 0.0)                                  # linear1 + ReLU
        t = jnp.dot(t.astype(jnp.bfloat16), w_ref[2 * k + 1],
                    preferred_element_type=jnp.float32) + b_ref[pl.ds(2 * k + 1, 1), :]
        h_ref[...] = jnp.maximum(t + h, 0.0)                     # linear2 + residual + ReLU
        return carry

    jax.lax.fori_loop(0, nb, block, 0, unroll=(nb <= 8))

    final = jnp.dot(h_ref[...].astype(jnp.bfloat16), w_ref[nsteps - 1],
                    preferred_element_type=jnp.float32) + b_ref[pl.ds(nsteps - 1, 1), :]
    o_ref[...] = final.astype(o_ref.dtype)


def _resmlp_streamed_kernel(x_ref, w_ref, b_ref, o_ref, h_ref, t_ref):
    """Streamed path.  grid = (batch_tiles, 2*nb+1), ONE weight matrix per step.

    Step 2k   : t = relu(h @ w1_k + b1_k)
    Step 2k+1 : h = relu(t @ w2_k + b2_k + h)
    Last step : o = h @ wf + bf            (wf streamed like any other block)

    x_ref: (Bt, Hp) f32 (constant across the block axis)
    w_ref: (Hp, Hp) bf16 (leading step dim squeezed; double-buffered by Pallas)
    b_ref: (2*nb+1, Hp) f32 resident bias table
    """
    j = pl.program_id(1)
    nsteps = pl.num_programs(1)
    bias = b_ref[pl.ds(j, 1), :]                      # (1, Hp) f32

    @pl.when(j == 0)
    def _():
        h_ref[...] = x_ref[...]

    is_final = j == nsteps - 1

    @pl.when(jnp.logical_and(j % 2 == 0, jnp.logical_not(is_final)))
    def _():                                          # linear1 + ReLU
        t = jnp.dot(h_ref[...].astype(jnp.bfloat16), w_ref[...],
                    preferred_element_type=jnp.float32) + bias
        t_ref[...] = jnp.maximum(t, 0.0)

    @pl.when(j % 2 == 1)
    def _():                                          # linear2 + residual + ReLU
        t = jnp.dot(t_ref[...].astype(jnp.bfloat16), w_ref[...],
                    preferred_element_type=jnp.float32) + bias + h_ref[...]
        h_ref[...] = jnp.maximum(t, 0.0)

    @pl.when(is_final)
    def _():                                          # final Linear
        o = jnp.dot(h_ref[...].astype(jnp.bfloat16), w_ref[...],
                    preferred_element_type=jnp.float32) + bias
        o_ref[...] = o.astype(o_ref.dtype)


# ---------------------------------------------------------------------------------
# Parameter prep (one-time, hoisted out of the forward path)
# ---------------------------------------------------------------------------------

def init_params(key, hidden_dim, num_blocks):
    """PyTorch-Linear-style f32 params; weights stored pre-transposed (y = x @ w + b)."""
    ks = jax.random.split(key, 6)
    bound = 1.0 / np.sqrt(hidden_dim)
    u = lambda k, shape: jax.random.uniform(k, shape, jnp.float32, -bound, bound)
    return {
        "w1": u(ks[0], (num_blocks, hidden_dim, hidden_dim)),
        "b1": u(ks[1], (num_blocks, hidden_dim)),
        "w2": u(ks[2], (num_blocks, hidden_dim, hidden_dim)),
        "b2": u(ks[3], (num_blocks, hidden_dim)),
        "wf": u(ks[4], (hidden_dim, hidden_dim)),
        "bf": u(ks[5], (hidden_dim,)),
    }


def prepare_params(params):
    """One-time pad/cast/pack of the weight stack (NOT per forward call).

    Weights -> bf16, hidden dim padded to a lane-dense multiple of 128 (skipped when
    already aligned), packed in per-step order [w1_0, w2_0, w1_1, w2_1, ..., wf].
    Padded feature columns are zero so real outputs are bit-identical.
    """
    w1, w2, wf = params["w1"], params["w2"], params["wf"]
    b1, b2, bf = params["b1"], params["b2"], params["bf"]
    nb, H, _ = w1.shape
    Hp = _round_up(max(H, 128), 128)
    dh = Hp - H
    bf16, f32 = jnp.bfloat16, jnp.float32

    def padw(w):
        w = w.astype(bf16)
        if dh:
            w = jnp.pad(w, [(0, 0)] * (w.ndim - 2) + [(0, dh), (0, dh)])
        return w

    def padb(b):
        b = b.astype(f32)
        if dh:
            b = jnp.pad(b, [(0, 0)] * (b.ndim - 1) + [(0, dh)])
        return b

    w1p, w2p, wfp = padw(w1), padw(w2), padw(wf)
    b1p, b2p, bfp = padb(b1), padb(b2), padb(bf.reshape(1, H))

    wstack = jnp.concatenate(
        [jnp.stack([w1p, w2p], axis=1).reshape(2 * nb, Hp, Hp), wfp[None]], axis=0)
    bstack = jnp.concatenate(
        [jnp.stack([b1p, b2p], axis=1).reshape(2 * nb, Hp), bfp], axis=0)
    return {"wstack": wstack, "bstack": bstack, "H": H, "Hp": Hp, "nb": nb}


# ---------------------------------------------------------------------------------
# Forward
# ---------------------------------------------------------------------------------

def resmlp_forward(x, prepped, *, force_streamed=False, force_b_tile=None):
    """x: (B, H) float.  prepped: output of prepare_params()."""
    B, H = x.shape
    assert H == prepped["H"]
    Hp, nb = prepped["Hp"], prepped["nb"]
    nsteps = 2 * nb + 1
    wstack, bstack = prepped["wstack"], prepped["bstack"]
    f32 = jnp.float32

    budget = _vmem_budget_bytes()
    weight_bytes = nsteps * Hp * Hp * 2                       # bf16 weight stack
    bias_bytes = _round_up(nsteps, 8) * Hp * 4                # f32 bias table (sublane-padded)

    # Whole-stack residency whenever the packed weights fit comfortably; else stream.
    resident = (not force_streamed) and (weight_bytes + bias_bytes <= int(budget * 0.6))

    if resident:
        fixed = weight_bytes + bias_bytes
        per_row = (2 + 2 + 1) * Hp * 4        # x (2 bufs) + out (2 bufs) + h scratch
    else:
        fixed = 2 * Hp * Hp * 2 + bias_bytes  # one double-buffered streamed weight block
        per_row = (2 + 2 + 1 + 1) * Hp * 4    # + t scratch
        # TODO(synk): for Hp >= ~4k on v7x (64 MiB VMEM) add output-feature (N) tiling
        # of the streamed weight blocks; a single double-buffered (Hp, Hp) block gets tight.

    avail = max(budget - fixed, 0)
    b_tile_cap = max(int(avail * 0.85) // per_row, 8)

    # Batch tile: whole (padded) batch when it fits, otherwise the largest tile the
    # budget allows (multiple of 128 for MXU efficiency).  This keeps arithmetic
    # intensity (~b_tile flops per streamed weight byte) above the HBM roofline.
    if force_b_tile is not None:
        b_tile = _round_up(int(force_b_tile), 8)
    else:
        whole = _round_up(B, 8)
        if whole <= b_tile_cap:
            b_tile = whole
        elif b_tile_cap >= 128:
            b_tile = (b_tile_cap // 128) * 128
        else:
            b_tile = (b_tile_cap // 8) * 8
    b_tile = max(min(b_tile, _round_up(B, 8)), 8)
    Bp = _round_up(B, b_tile)
    n_btiles = Bp // b_tile

    # Keep the batch-tile count even when several tiles are needed so the "parallel"
    # axis load-balances across v7x's two TensorCores.
    if force_b_tile is None and n_btiles >= 3 and n_btiles % 2 == 1:
        step = 128 if b_tile > 128 else 8
        b_tile2 = max(_round_up(_cdiv(B, n_btiles + 1), step), 8)
        Bp2 = _round_up(B, b_tile2)
        if (Bp2 // b_tile2) % 2 == 0:
            b_tile, Bp, n_btiles = b_tile2, Bp2, Bp2 // b_tile2

    # Pad x only when needed.  Padded feature columns stay exactly zero through every
    # block; padded batch rows pick up biases but are sliced off below (wasted flops only).
    if Bp != B or Hp != H:
        xp = jnp.zeros((Bp, Hp), f32).at[:B, :H].set(x.astype(f32))
    else:
        xp = x.astype(f32)

    resident_spec = pl.BlockSpec(memory_space=pltpu.MemorySpace.VMEM)  # full array, 1 copy

    if resident:
        kernel = _resmlp_resident_kernel
        grid = (n_btiles,)
        in_specs = [
            pl.BlockSpec((b_tile, Hp), lambda i: (i, 0)),            # x per batch tile
            resident_spec,                                           # weight stack (once)
            resident_spec,                                           # bias table (once)
        ]
        out_specs = pl.BlockSpec((b_tile, Hp), lambda i: (i, 0))
        scratch = [pltpu.VMEM((b_tile, Hp), f32)]
        dims = ("parallel",)
        bytes_accessed = weight_bytes + bias_bytes + 2 * Bp * Hp * 4
    else:
        kernel = _resmlp_streamed_kernel
        grid = (n_btiles, nsteps)
        in_specs = [
            pl.BlockSpec((b_tile, Hp), lambda i, j: (i, 0)),         # x (constant in j)
            pl.BlockSpec((None, Hp, Hp), lambda i, j: (j, 0, 0)),    # one weight per step
            resident_spec,                                           # bias table resident
        ]
        out_specs = pl.BlockSpec((b_tile, Hp), lambda i, j: (i, 0))
        scratch = [pltpu.VMEM((b_tile, Hp), f32), pltpu.VMEM((b_tile, Hp), f32)]
        dims = ("parallel", "arbitrary")
        bytes_accessed = n_btiles * weight_bytes + bias_bytes + 2 * Bp * Hp * 4

    cost = pl.CostEstimate(flops=int(2 * Bp * Hp * Hp * nsteps), transcendentals=0,
                           bytes_accessed=int(bytes_accessed))

    out = pl.pallas_call(
        kernel,
        out_shape=jax.ShapeDtypeStruct((Bp, Hp), f32),
        grid_spec=pltpu.PrefetchScalarGridSpec(
            num_scalar_prefetch=0,
            grid=grid,
            in_specs=in_specs,
            out_specs=out_specs,
            scratch_shapes=scratch,
        ),
        compiler_params=pltpu.CompilerParams(
            dimension_semantics=dims,
            vmem_limit_bytes=int(budget),
        ),
        cost_estimate=cost,
    )(xp, wstack, bstack)

    if Bp != B or Hp != H:
        out = out[:B, :H]
    return out


# ---------------------------------------------------------------------------------
# Reference & test
# ---------------------------------------------------------------------------------

def resmlp_reference(x, params):
    """Pure-JAX reference matching the kernel numerics (bf16 MXU inputs, f32 accumulate
    and f32 bias/ReLU/residual).  Weights as bf16 is a deliberate precision trade vs.
    the f32 PyTorch nn.Linear."""
    bf16 = jnp.bfloat16
    h = x.astype(jnp.float32)
    nb = params["w1"].shape[0]
    for i in range(nb):
        r = h
        t = jnp.dot(h.astype(bf16), params["w1"][i].astype(bf16),
                    preferred_element_type=jnp.float32) + params["b1"][i]
        t = jnp.maximum(t, 0.0)
        t = jnp.dot(t.astype(bf16), params["w2"][i].astype(bf16),
                    preferred_element_type=jnp.float32) + params["b2"][i]
        h = jnp.maximum(t + r, 0.0)
    return jnp.dot(h.astype(bf16), params["wf"].astype(bf16),
                   preferred_element_type=jnp.float32) + params["bf"]


if __name__ == "__main__":
    B, H, NUM_BLOCKS = 16, 32, 2   # hidden=32 exercises the lane-padding path

    key = jax.random.PRNGKey(0)
    kx, kp = jax.random.split(key)
    x = jax.random.normal(kx, (B, H), dtype=jnp.float32)
    params = init_params(kp, H, NUM_BLOCKS)

    prepped = prepare_params(params)          # one-time pad/cast/pack (hoisted out of forward)
    ref = resmlp_reference(x, params)

    # Default path at these shapes: whole weight stack resident, single batch tile.
    out_resident = jax.block_until_ready(resmlp_forward(x, prepped))
    np.testing.assert_allclose(np.asarray(out_resident), np.asarray(ref),
                               rtol=5e-3, atol=5e-3)

    # Streamed path (used when the weight stack exceeds the VMEM budget), forced here
    # at tiny shapes to exercise the 2-D grid + per-step weight streaming as well.
    out_streamed = jax.block_until_ready(
        resmlp_forward(x, prepped, force_streamed=True, force_b_tile=8))
    np.testing.assert_allclose(np.asarray(out_streamed), np.asarray(ref),
                               rtol=5e-3, atol=5e-3)

    print("KERNEL_OK")
</pallas_src>

<mosaic_0001>
module attributes {stable_mosaic.version = 11 : i64} {
  func.func @_resmlp_resident_kernel(%arg0: i32, %arg1: memref<16x128xf32, #tpu.memory_space<vmem>>, %arg2: memref<5x128x128xbf16, #tpu.memory_space<vmem>>, %arg3: memref<5x128xf32, #tpu.memory_space<vmem>>, %arg4: memref<16x128xf32, #tpu.memory_space<vmem>>, %arg5: memref<16x128xf32, #tpu.memory_space<vmem>>) attributes {dimension_semantics = [#tpu.dimension_semantics<parallel>], iteration_bounds = array<i64: 1>, scalar_prefetch = 0 : i64, scratch_operands = 1 : i64, tpu.core_type = #tpu.core_type<tc>, window_params = [{transform_indices = @transform_0, window_bounds = array<i64: 16, 128>}, {pipeline_mode = #tpu.pipeline_mode<synchronous>, transform_indices = @transform_1, window_bounds = array<i64: 5, 128, 128>}, {pipeline_mode = #tpu.pipeline_mode<synchronous>, transform_indices = @transform_2, window_bounds = array<i64: 5, 128>}, {transform_indices = @transform_3, window_bounds = array<i64: 16, 128>}]} {
    %c0 = arith.constant 0 : index
    %c0_0 = arith.constant 0 : index
    %0 = vector.load %arg1[%c0, %c0_0] : memref<16x128xf32, #tpu.memory_space<vmem>>, vector<16x128xf32>
    %c0_1 = arith.constant 0 : index
    %c0_2 = arith.constant 0 : index
    %1 = vector.load %arg5[%c0_1, %c0_2] : memref<16x128xf32, #tpu.memory_space<vmem>>, vector<16x128xf32>
    tpu.vector_store %arg5[%c0_1, %c0_2], %0 {strides = array<i32>} : memref<16x128xf32, #tpu.memory_space<vmem>>, vector<16x128xf32>,
    %c0_i32 = arith.constant 0 : i32
    %c0_3 = arith.constant 0 : index
    %c0_4 = arith.constant 0 : index
    %2 = vector.load %arg5[%c0_3, %c0_4] : memref<16x128xf32, #tpu.memory_space<vmem>>, vector<16x128xf32>
    %3 = arith.truncf %2 : vector<16x128xf32> to vector<16x128xbf16>
    %c2_i32 = arith.constant 2 : i32
    %4 = arith.muli %c2_i32, %c0_i32 : i32
    %5 = arith.index_cast %4 : i32 to index
    %c0_5 = arith.constant 0 : index
    %c0_6 = arith.constant 0 : index
    %6 = vector.load %arg2[%5, %c0_5, %c0_6] : memref<5x128x128xbf16, #tpu.memory_space<vmem>>, vector<1x128x128xbf16>
    %7 = vector.shape_cast %6 : vector<1x128x128xbf16> to vector<128x128xbf16>
    %cst = arith.constant dense<0.000000e+00> : vector<16x128xf32>
    %8 = tpu.matmul %3, %7, %cst {dimension_numbers = #tpu.dot_dimension_numbers<[1], [0], [0], [1], [0, 0, 1, 1], [], []>} : vector<16x128xbf16>, vector<128x128xbf16>, vector<16x128xf32> -> vector<16x128xf32>
    %c2_i32_7 = arith.constant 2 : i32
    %9 = arith.muli %c2_i32_7, %c0_i32 : i32
    %10 = arith.index_cast %9 : i32 to index
    %c0_8 = arith.constant 0 : index
    %11 = vector.load %arg3[%10, %c0_8] : memref<5x128xf32, #tpu.memory_space<vmem>>, vector<1x128xf32>
    %12 = vector.broadcast %11 : vector<1x128xf32> to vector<16x128xf32>
    %13 = arith.addf %8, %12 : vector<16x128xf32>
    %cst_9 = arith.constant 0.000000e+00 : f32
    %14 = vector.broadcast %cst_9 : f32 to vector<16x128xf32>
    %15 = arith.maximumf %13, %14 : vector<16x128xf32>
    %16 = arith.truncf %15 : vector<16x128xf32> to vector<16x128xbf16>
    %c2_i32_10 = arith.constant 2 : i32
    %17 = arith.muli %c2_i32_10, %c0_i32 : i32
    %c1_i32 = arith.constant 1 : i32
    %18 = arith.addi %17, %c1_i32 : i32
    %19 = arith.index_cast %18 : i32 to index
    %c0_11 = arith.constant 0 : index
    %c0_12 = arith.constant 0 : index
    %20 = vector.load %arg2[%19, %c0_11, %c0_12] : memref<5x128x128xbf16, #tpu.memory_space<vmem>>, vector<1x128x128xbf16>
    %21 = vector.shape_cast %20 : vector<1x128x128xbf16> to vector<128x128xbf16>
    %cst_13 = arith.constant dense<0.000000e+00> : vector<16x128xf32>
    %22 = tpu.matmul %16, %21, %cst_13 {dimension_numbers = #tpu.dot_dimension_numbers<[1], [0], [0], [1], [0, 0, 1, 1], [], []>} : vector<16x128xbf16>, vector<128x128xbf16>, vector<16x128xf32> -> vector<16x128xf32>
    %c2_i32_14 = arith.constant 2 : i32
    %23 = arith.muli %c2_i32_14, %c0_i32 : i32
    %c1_i32_15 = arith.constant 1 : i32
    %24 = arith.addi %23, %c1_i32_15 : i32
    %25 = arith.index_cast %24 : i32 to index
    %c0_16 = arith.constant 0 : index
    %26 = vector.load %arg3[%25, %c0_16] : memref<5x128xf32, #tpu.memory_space<vmem>>, vector<1x128xf32>
    %27 = vector.broadcast %26 : vector<1x128xf32> to vector<16x128xf32>
    %28 = arith.addf %22, %27 : vector<16x128xf32>
    %29 = arith.addf %28, %2 : vector<16x128xf32>
    %cst_17 = arith.constant 0.000000e+00 : f32
    %30 = vector.broadcast %cst_17 : f32 to vector<16x128xf32>
    %31 = arith.maximumf %29, %30 : vector<16x128xf32>
    %c0_18 = arith.constant 0 : index
    %c0_19 = arith.constant 0 : index
    %32 = vector.load %arg5[%c0_18, %c0_19] : memref<16x128xf32, #tpu.memory_space<vmem>>, vector<16x128xf32>
    tpu.vector_store %arg5[%c0_18, %c0_19], %31 {strides = array<i32>} : memref<16x128xf32, #tpu.memory_space<vmem>>, vector<16x128xf32>,
    %c1_i32_20 = arith.constant 1 : i32
    %c0_21 = arith.constant 0 : index
    %c0_22 = arith.constant 0 : index
    %33 = vector.load %arg5[%c0_21, %c0_22] : memref<16x128xf32, #tpu.memory_space<vmem>>, vector<16x128xf32>
    %34 = arith.truncf %33 : vector<16x128xf32> to vector<16x128xbf16>
    %c2_i32_23 = arith.constant 2 : i32
    %35 = arith.muli %c2_i32_23, %c1_i32_20 : i32
    %36 = arith.index_cast %35 : i32 to index
    %c0_24 = arith.constant 0 : index
    %c0_25 = arith.constant 0 : index
    %37 = vector.load %arg2[%36, %c0_24, %c0_25] : memref<5x128x128xbf16, #tpu.memory_space<vmem>>, vector<1x128x128xbf16>
    %38 = vector.shape_cast %37 : vector<1x128x128xbf16> to vector<128x128xbf16>
    %cst_26 = arith.constant dense<0.000000e+00> : vector<16x128xf32>
    %39 = tpu.matmul %34, %38, %cst_26 {dimension_numbers = #tpu.dot_dimension_numbers<[1], [0], [0], [1], [0, 0, 1, 1], [], []>} : vector<16x128xbf16>, vector<128x128xbf16>, vector<16x128xf32> -> vector<16x128xf32>
    %c2_i32_27 = arith.constant 2 : i32
    %40 = arith.muli %c2_i32_27, %c1_i32_20 : i32
    %41 = arith.index_cast %40 : i32 to index
    %c0_28 = arith.constant 0 : index
    %42 = vector.load %arg3[%41, %c0_28] : memref<5x128xf32, #tpu.memory_space<vmem>>, vector<1x128xf32>
    %43 = vector.broadcast %42 : vector<1x128xf32> to vector<16x128xf32>
    %44 = arith.addf %39, %43 : vector<16x128xf32>
    %cst_29 = arith.constant 0.000000e+00 : f32
    %45 = vector.broadcast %cst_29 : f32 to vector<16x128xf32>
    %46 = arith.maximumf %44, %45 : vector<16x128xf32>
    %47 = arith.truncf %46 : vector<16x128xf32> to vector<16x128xbf16>
    %c2_i32_30 = arith.constant 2 : i32
    %48 = arith.muli %c2_i32_30, %c1_i32_20 : i32
    %c1_i32_31 = arith.constant 1 : i32
    %49 = arith.addi %48, %c1_i32_31 : i32
    %50 = arith.index_cast %49 : i32 to index
    %c0_32 = arith.constant 0 : index
    %c0_33 = arith.constant 0 : index
    %51 = vector.load %arg2[%50, %c0_32, %c0_33] : memref<5x128x128xbf16, #tpu.memory_space<vmem>>, vector<1x128x128xbf16>
    %52 = vector.shape_cast %51 : vector<1x128x128xbf16> to vector<128x128xbf16>
    %cst_34 = arith.constant dense<0.000000e+00> : vector<16x128xf32>
    %53 = tpu.matmul %47, %52, %cst_34 {dimension_numbers = #tpu.dot_dimension_numbers<[1], [0], [0], [1], [0, 0, 1, 1], [], []>} : vector<16x128xbf16>, vector<128x128xbf16>, vector<16x128xf32> -> vector<16x128xf32>
    %c2_i32_35 = arith.constant 2 : i32
    %54 = arith.muli %c2_i32_35, %c1_i32_20 : i32
    %c1_i32_36 = arith.constant 1 : i32
    %55 = arith.addi %54, %c1_i32_36 : i32
    %56 = arith.index_cast %55 : i32 to index
    %c0_37 = arith.constant 0 : index
    %57 = vector.load %arg3[%56, %c0_37] : memref<5x128xf32, #tpu.memory_space<vmem>>, vector<1x128xf32>
    %58 = vector.broadcast %57 : vector<1x128xf32> to vector<16x128xf32>
    %59 = arith.addf %53, %58 : vector<16x128xf32>
    %60 = arith.addf %59, %33 : vector<16x128xf32>
    %cst_38 = arith.constant 0.000000e+00 : f32
    %61 = vector.broadcast %cst_38 : f32 to vector<16x128xf32>
    %62 = arith.maximumf %60, %61 : vector<16x128xf32>
    %c0_39 = arith.constant 0 : index
    %c0_40 = arith.constant 0 : index
    %63 = vector.load %arg5[%c0_39, %c0_40] : memref<16x128xf32, #tpu.memory_space<vmem>>, vector<16x128xf32>
    tpu.vector_store %arg5[%c0_39, %c0_40], %62 {strides = array<i32>} : memref<16x128xf32, #tpu.memory_space<vmem>>, vector<16x128xf32>,
    %c2_i32_41 = arith.constant 2 : i32
    %c0_42 = arith.constant 0 : index
    %c0_43 = arith.constant 0 : index
    %64 = vector.load %arg5[%c0_42, %c0_43] : memref<16x128xf32, #tpu.memory_space<vmem>>, vector<16x128xf32>
    %65 = arith.truncf %64 : vector<16x128xf32> to vector<16x128xbf16>
    %c4 = arith.constant 4 : index
    %c0_44 = arith.constant 0 : index
    %c0_45 = arith.constant 0 : index
    %66 = vector.load %arg2[%c4, %c0_44, %c0_45] : memref<5x128x128xbf16, #tpu.memory_space<vmem>>, vector<1x128x128xbf16>
    %67 = vector.shape_cast %66 : vector<1x128x128xbf16> to vector<128x128xbf16>
    %cst_46 = arith.constant dense<0.000000e+00> : vector<16x128xf32>
    %68 = tpu.matmul %65, %67, %cst_46 {dimension_numbers = #tpu.dot_dimension_numbers<[1], [0], [0], [1], [0, 0, 1, 1], [], []>} : vector<16x128xbf16>, vector<128x128xbf16>, vector<16x128xf32> -> vector<16x128xf32>
    %c4_47 = arith.constant 4 : index
    %c0_48 = arith.constant 0 : index
    %69 = vector.load %arg3[%c4_47, %c0_48] : memref<5x128xf32, #tpu.memory_space<vmem>>, vector<1x128xf32>
    %70 = vector.broadcast %69 : vector<1x128xf32> to vector<16x128xf32>
    %71 = arith.addf %68, %70 : vector<16x128xf32>
    %c0_49 = arith.constant 0 : index
    %c0_50 = arith.constant 0 : index
    %72 = vector.load %arg4[%c0_49, %c0_50] : memref<16x128xf32, #tpu.memory_space<vmem>>, vector<16x128xf32>
    tpu.vector_store %arg4[%c0_49, %c0_50], %71 {strides = array<i32>} : memref<16x128xf32, #tpu.memory_space<vmem>>, vector<16x128xf32>,
    return
  }
  func.func @transform_0(%arg0: i32) -> (i32, i32) {
    %c0_i32 = arith.constant 0 : i32
    %c0_i32_0 = arith.constant 0 : i32
    return %arg0, %c0_i32 : i32, i32
  }
  func.func @transform_1(%arg0: i32) -> (i32, i32, i32) {
    %c0_i32 = arith.constant 0 : i32
    %c0_i32_0 = arith.constant 0 : i32
    %c0_i32_1 = arith.constant 0 : i32
    %c0_i32_2 = arith.constant 0 : i32
    return %c0_i32, %c0_i32_0, %c0_i32_1 : i32, i32, i32
  }
  func.func @transform_2(%arg0: i32) -> (i32, i32) {
    %c0_i32 = arith.constant 0 : i32
    %c0_i32_0 = arith.constant 0 : i32
    %c0_i32_1 = arith.constant 0 : i32
    return %c0_i32, %c0_i32_0 : i32, i32
  }
  func.func @transform_3(%arg0: i32) -> (i32, i32) {
    %c0_i32 = arith.constant 0 : i32
    %c0_i32_0 = arith.constant 0 : i32
    return %arg0, %c0_i32 : i32, i32
  }
}

</mosaic_0001>

<llo_original>
// kernel: tpu_custom_call.1
$region0: #{tpu_custom_call.1}
  #allocation0 [shape = 'u32[]', space=smem, size = 0x4, offset = 0x4, fixed_abs, tag = 'smem constant byte address 0x4 - core index']
  #allocation1 [shape = 'u32[72,128]{1,0:T(1,128)}', space=vmem, size = 0x9000, scoped, tag = 'internal scratch']
  #allocation2 [shape = 'f32[16,128]{1,0:T(8,128)}', space=vmem, size = 0x2000, scoped, tag = 'scratch operand']
  %s0 = inlined_call_operand.hbm [shape: f32[16,128], index: 0, kind: input, shape index: {}]
  %s1 = inlined_call_operand.hbm [shape: bf16[5,128,128], index: 1, kind: input, shape index: {}]
  %s2 = inlined_call_operand.hbm [shape: f32[5,128], index: 2, kind: input, shape index: {}]
  %s3 = inlined_call_operand.hbm [shape: f32[16,128], index: 3, kind: output, shape index: {}]
  %s4 = sld [smem:[#allocation0]]
  $region34: #{tpu_custom_call.1} parent=0
    _
  %s6 = ssub.s32 1, %s4
  %s7 = scalar_select 0, %s6, %s4
  $region1: #{tpu_custom_call.1} parent=0
    #allocation3 [shape = 'u8[8192]{0}', space=vmem, size = 0x2000, scoped, tag = 'input window, operand 0, single buffered']
    #allocation4 [shape = 's32[1]{0}', space=sflag, size = 0x4, scoped, tag = 'scoped memory for tpu_custom_call.1']
    #allocation5 [shape = 's32[1]{0}', space=sflag, size = 0x4, scoped, tag = 'scoped memory for tpu_custom_call.1']
    #allocation6 [shape = 'u8[163840]{0}', space=vmem, size = 0x28000, scoped, tag = 'input window, operand 1, single buffered']
    #allocation7 [shape = 's32[1]{0}', space=sflag, size = 0x4, scoped, tag = 'scoped memory for tpu_custom_call.1']
    #allocation8 [shape = 'u8[4096]{0}', space=vmem, size = 0x1000, scoped, tag = 'input window, operand 2, single buffered']
    #allocation9 [shape = 'u8[8192]{0}', space=vmem, size = 0x2000, scoped, tag = 'output window, operand 0, single buffered']
    %8 = vsyncpa [#allocation4], 0
    %9 = vsyncpa [#allocation7], 0
    %10 = vsyncpa [#allocation5], 0
    // Predicated region
    $region2: #{tpu_custom_call.1} parent=1 // pred_check
      _
    $region3: #{tpu_custom_call.1} parent=1 // pred_check_branch
      %12 = sbr.rel (0) target = $region5
    $region4: #{tpu_custom_call.1} parent=1 // pred_region
      %14 = vsyncadd [#allocation4], 0
      %s15 = sshll.u32 %s0, 4
      %s16 = int_to_ptr.hbm [resolvable:$true] %s15
      %s17 = sshll.u32 [#allocation3], 4
      %s18 = int_to_ptr.vmem [resolvable:$true] %s17
      %23 = dma.hbm_to_vmem [thread:$0]  %s16, 256, %s18, [#allocation4], 128, 128, 8
    $region5: #{tpu_custom_call.1} parent=1 // pred_fallthru
      _
    // Predicated region
    $region6: #{tpu_custom_call.1} parent=1 // pred_check
      _
    $region7: #{tpu_custom_call.1} parent=1 // pred_check_branch
      %25 = sbr.rel (0) target = $region9
    $region8: #{tpu_custom_call.1} parent=1 // pred_region
      %27 = vsyncadd [#allocation7], 0
      %s28 = sshll.u32 %s1, 4
      %s29 = int_to_ptr.hbm [resolvable:$true] %s28
      %s30 = sshll.u32 [#allocation6], 4
      %s31 = int_to_ptr.vmem [resolvable:$true] %s30
      %36 = dma.hbm_to_vmem [thread:$0]  %s29, 5120, %s31, [#allocation7], 64, 64, 4
    $region9: #{tpu_custom_call.1} parent=1 // pred_fallthru
      _
    // Predicated region
    $region10: #{tpu_custom_call.1} parent=1 // pred_check
      _
    $region11: #{tpu_custom_call.1} parent=1 // pred_check_branch
      %38 = sbr.rel (0) target = $region13
    $region12: #{tpu_custom_call.1} parent=1 // pred_region
      %40 = vsyncadd [#allocation7], 0
      %s42 = sshll.u32 %s2, 4
      %s43 = int_to_ptr.hbm [resolvable:$true] %s42
      %s44 = sshll.u32 [#allocation8], 4
      %s45 = int_to_ptr.vmem [resolvable:$true] %s44
      %47 = dma.hbm_to_vmem [thread:$0]  %s43, 128, %s45, [#allocation7]
    $region13: #{tpu_custom_call.1} parent=1 // pred_fallthru
      _
    // Predicated region
    $region14: #{tpu_custom_call.1} parent=1 // pred_check
      _
    $region15: #{tpu_custom_call.1} parent=1 // pred_check_branch
      %49 = sbr.rel (0) target = $region17
    $region16: #{tpu_custom_call.1} parent=1 // pred_region
      %51 = dma.done [#allocation4], 256
    $region17: #{tpu_custom_call.1} parent=1 // pred_fallthru
      _
    // Predicated region
    $region18: #{tpu_custom_call.1} parent=1 // pred_check
      _
    $region19: #{tpu_custom_call.1} parent=1 // pred_check_branch
      %53 = sbr.rel (0) target = $region21
    $region20: #{tpu_custom_call.1} parent=1 // pred_region
      %55 = dma.done [#allocation7], 5120
    $region21: #{tpu_custom_call.1} parent=1 // pred_fallthru
      _
    // Predicated region
    $region22: #{tpu_custom_call.1} parent=1 // pred_check
      _
    $region23: #{tpu_custom_call.1} parent=1 // pred_check_branch
      %57 = sbr.rel (0) target = $region25
    $region24: #{tpu_custom_call.1} parent=1 // pred_region
      %59 = dma.done [#allocation7], 128
    $region25: #{tpu_custom_call.1} parent=1 // pred_fallthru
      _
    %v60 = vld [vmem:[#allocation3] sm:$0xff]
    %v61 = vld [vmem:[#allocation3 + $0x8] sm:$0xff]
    %62 = vst [vmem:[#allocation2] sm:$0xff] %v60
    %63 = vst [vmem:[#allocation2 + $0x8] sm:$0xff] %v61
    %v64 = vld [vmem:[#allocation2] sm:$0xff]
    %v65 = vld [vmem:[#allocation2 + $0x8] sm:$0xff]
    %v66 = vpack.c.bf16 %v65, %v64
    %v67 = vld [vmem:[#allocation6] sm:$0xf]
    %v68 = vld [vmem:[#allocation6 + $0x4] sm:$0xf]
    %v69 = vld [vmem:[#allocation6 + $0x8] sm:$0xf]
    %v70 = vld [vmem:[#allocation6 + $0xc] sm:$0xf]
    %v71 = vld [vmem:[#allocation6 + $0x10] sm:$0xf]
    %v72 = vld [vmem:[#allocation6 + $0x14] sm:$0xf]
    %v73 = vld [vmem:[#allocation6 + $0x18] sm:$0xf]
    %v74 = vld [vmem:[#allocation6 + $0x1c] sm:$0xf]
    %v75 = vld [vmem:[#allocation6 + $0x20] sm:$0xf]
    %v76 = vld [vmem:[#allocation6 + $0x24] sm:$0xf]
    %v77 = vld [vmem:[#allocation6 + $0x28] sm:$0xf]
    %v78 = vld [vmem:[#allocation6 + $0x2c] sm:$0xf]
    %v79 = vld [vmem:[#allocation6 + $0x30] sm:$0xf]
    %v80 = vld [vmem:[#allocation6 + $0x34] sm:$0xf]
    %v81 = vld [vmem:[#allocation6 + $0x38] sm:$0xf]
    %v82 = vld [vmem:[#allocation6 + $0x3c] sm:$0xf]
    %v83 = vld [vmem:[#allocation8] sm:$0x1]
    %v84 = vperm.slane %v83, 0
    %v101 = vunpack.c.l.b16 %v67
    %v102 = vunpack.c.l.b16 %v68
    %v103 = vunpack.c.l.b16 %v69
    %v104 = vunpack.c.l.b16 %v70
    %v105 = vunpack.c.l.b16 %v71
    %v106 = vunpack.c.l.b16 %v72
    %v107 = vunpack.c.l.b16 %v73
    %v108 = vunpack.c.l.b16 %v74
    %v109 = vunpack.c.l.b16 %v75
    %v110 = vunpack.c.l.b16 %v76
    %v111 = vunpack.c.l.b16 %v77
    %v112 = vunpack.c.l.b16 %v78
    %v113 = vunpack.c.l.b16 %v79
    %v114 = vunpack.c.l.b16 %v80
    %v115 = vunpack.c.l.b16 %v81
    %v116 = vunpack.c.l.b16 %v82
    %v117 = vpack.c.b16 %v102, %v101
    %v118 = vpack.c.b16 %v104, %v103
    %v119 = vpack.c.b16 %v106, %v105
    %v120 = vpack.c.b16 %v108, %v107
    %v121 = vpack.c.b16 %v110, %v109
    %v122 = vpack.c.b16 %v112, %v111
    %v123 = vpack.c.b16 %v114, %v113
    %v124 = vpack.c.b16 %v116, %v115
    %133 = vmatpush.bf16.msra.mxu0 %v124
    %134 = vmatpush.bf16.msra.mxu0 %v123
    %135 = vmatpush.bf16.msra.mxu0 %v122
    %136 = vmatpush.bf16.msra.mxu0 %v121
    %137 = vmatpush.bf16.msra.mxu0 %v120
    %138 = vmatpush.bf16.msra.mxu0 %v119
    %139 = vmatpush.bf16.msra.mxu0 %v118
    %140 = vmatpush.bf16.msra.mxu0 %v117
    %141 = vmatmul.bf16.gmra.mxu0 %v66
    %v142 = vpop.f32.mrf.mxu0
    %v143 = vadd.f32 %v84, %v142
    %v144 = vpop.f32.mrf.mxu0
    %v145 = vadd.f32 %v84, %v144
    %146 = vdwg.mxu0
    %v147 = vmax.f32 %v143, 0.0
    %v148 = vmax.f32 %v145, 0.0
    %v149 = vpack.c.bf16 %v148, %v147
    %s150 = scalar_lea.vmem [#allocation6], 64
    %v151 = vld [vmem:[%s150] sm:$0xf]
    %v152 = vld [vmem:[%s150 + $0x4] sm:$0xf]
    %v153 = vld [vmem:[%s150 + $0x8] sm:$0xf]
    %v154 = vld [vmem:[%s150 + $0xc] sm:$0xf]
    %v155 = vld [vmem:[%s150 + $0x10] sm:$0xf]
    %v156 = vld [vmem:[%s150 + $0x14] sm:$0xf]
    %v157 = vld [vmem:[%s150 + $0x18] sm:$0xf]
    %v158 = vld [vmem:[%s150 + $0x1c] sm:$0xf]
    %v159 = vld [vmem:[%s150 + $0x20] sm:$0xf]
    %v160 = vld [vmem:[%s150 + $0x24] sm:$0xf]
    %v161 = vld [vmem:[%s150 + $0x28] sm:$0xf]
    %v162 = vld [vmem:[%s150 + $0x2c] sm:$0xf]
    %v163 = vld [vmem:[%s150 + $0x30] sm:$0xf]
    %v164 = vld [vmem:[%s150 + $0x34] sm:$0xf]
    %v165 = vld [vmem:[%s150 + $0x38] sm:$0xf]
    %v166 = vld [vmem:[%s150 + $0x3c] sm:$0xf]
    %v167 = vld [vmem:[#allocation8 + $0x1] sm:$0x1]
    %v168 = vperm.slane %v167, 0
    %v185 = vunpack.c.l.b16 %v151
    %v186 = vunpack.c.l.b16 %v152
    %v187 = vunpack.c.l.b16 %v153
    %v188 = vunpack.c.l.b16 %v154
    %v189 = vunpack.c.l.b16 %v155
    %v190 = vunpack.c.l.b16 %v156
    %v191 = vunpack.c.l.b16 %v157
    %v192 = vunpack.c.l.b16 %v158
    %v193 = vunpack.c.l.b16 %v159
    %v194 = vunpack.c.l.b16 %v160
    %v195 = vunpack.c.l.b16 %v161
    %v196 = vunpack.c.l.b16 %v162
    %v197 = vunpack.c.l.b16 %v163
    %v198 = vunpack.c.l.b16 %v164
    %v199 = vunpack.c.l.b16 %v165
    %v200 = vunpack.c.l.b16 %v166
    %v201 = vpack.c.b16 %v186, %v185
    %v202 = vpack.c.b16 %v188, %v187
    %v203 = vpack.c.b16 %v190, %v189
    %v204 = vpack.c.b16 %v192, %v191
    %v205 = vpack.c.b16 %v194, %v193
    %v206 = vpack.c.b16 %v196, %v195
    %v207 = vpack.c.b16 %v198, %v197
    %v208 = vpack.c.b16 %v200, %v199
    %217 = vmatpush.bf16.msra.mxu0 %v208
    %218 = vmatpush.bf16.msra.mxu0 %v207
    %219 = vmatpush.bf16.msra.mxu0 %v206
    %220 = vmatpush.bf16.msra.mxu0 %v205
    %221 = vmatpush.bf16.msra.mxu0 %v204
    %222 = vmatpush.bf16.msra.mxu0 %v203
    %223 = vmatpush.bf16.msra.mxu0 %v202
    %224 = vmatpush.bf16.msra.mxu0 %v201
    %225 = vmatmul.bf16.gmra.mxu0 %v149
    %v226 = vpop.f32.mrf.mxu0
    %v227 = vadd.f32 %v168, %v226
    %v228 = vpop.f32.mrf.mxu0
    %v229 = vadd.f32 %v168, %v228
    %230 = vdwg.mxu0
    %v231 = vadd.f32 %v227, %v64
    %v232 = vadd.f32 %v229, %v65
    %v233 = vmax.f32 %v231, 0.0
    %v234 = vmax.f32 %v232, 0.0
    %235 = vst [vmem:[#allocation2] sm:$0xff] %v233
    %236 = vst [vmem:[#allocation2 + $0x8] sm:$0xff] %v234
    %v237 = vld [vmem:[#allocation2] sm:$0xff]
    %v238 = vld [vmem:[#allocation2 + $0x8] sm:$0xff]
    %v239 = vpack.c.bf16 %v238, %v237
    %s240 = scalar_lea.vmem [#allocation6], 128
    %v241 = vld [vmem:[%s240] sm:$0xf]
    %v242 = vld [vmem:[%s240 + $0x4] sm:$0xf]
    %v243 = vld [vmem:[%s240 + $0x8] sm:$0xf]
    %v244 = vld [vmem:[%s240 + $0xc] sm:$0xf]
    %v245 = vld [vmem:[%s240 + $0x10] sm:$0xf]
    %v246 = vld [vmem:[%s240 + $0x14] sm:$0xf]
    %v247 = vld [vmem:[%s240 + $0x18] sm:$0xf]
    %v248 = vld [vmem:[%s240 + $0x1c] sm:$0xf]
    %v249 = vld [vmem:[%s240 + $0x20] sm:$0xf]
    %v250 = vld [vmem:[%s240 + $0x24] sm:$0xf]
    %v251 = vld [vmem:[%s240 + $0x28] sm:$0xf]
    %v252 = vld [vmem:[%s240 + $0x2c] sm:$0xf]
    %v253 = vld [vmem:[%s240 + $0x30] sm:$0xf]
    %v254 = vld [vmem:[%s240 + $0x34] sm:$0xf]
    %v255 = vld [vmem:[%s240 + $0x38] sm:$0xf]
    %v256 = vld [vmem:[%s240 + $0x3c] sm:$0xf]
    %v257 = vld [vmem:[#allocation8 + $0x2] sm:$0x1]
    %v258 = vperm.slane %v257, 0
    %v275 = vunpack.c.l.b16 %v241
    %v276 = vunpack.c.l.b16 %v242
    %v277 = vunpack.c.l.b16 %v243
    %v278 = vunpack.c.l.b16 %v244
    %v279 = vunpack.c.l.b16 %v245
    %v280 = vunpack.c.l.b16 %v246
    %v281 = vunpack.c.l.b16 %v247
    %v282 = vunpack.c.l.b16 %v248
    %v283 = vunpack.c.l.b16 %v249
    %v284 = vunpack.c.l.b16 %v250
    %v285 = vunpack.c.l.b16 %v251
    %v286 = vunpack.c.l.b16 %v252
    %v287 = vunpack.c.l.b16 %v253
    %v288 = vunpack.c.l.b16 %v254
    %v289 = vunpack.c.l.b16 %v255
    %v290 = vunpack.c.l.b16 %v256
    %v291 = vpack.c.b16 %v276, %v275
    %v292 = vpack.c.b16 %v278, %v277
    %v293 = vpack.c.b16 %v280, %v279
    %v294 = vpack.c.b16 %v282, %v281
    %v295 = vpack.c.b16 %v284, %v283
    %v296 = vpack.c.b16 %v286, %v285
    %v297 = vpack.c.b16 %v288, %v287
    %v298 = vpack.c.b16 %v290, %v289
    %307 = vmatpush.bf16.msra.mxu0 %v298
    %308 = vmatpush.bf16.msra.mxu0 %v297
    %309 = vmatpush.bf16.msra.mxu0 %v296
    %310 = vmatpush.bf16.msra.mxu0 %v295
    %311 = vmatpush.bf16.msra.mxu0 %v294
    %312 = vmatpush.bf16.msra.mxu0 %v293
    %313 = vmatpush.bf16.msra.mxu0 %v292
    %314 = vmatpush.bf16.msra.mxu0 %v291
    %315 = vmatmul.bf16.gmra.mxu0 %v239
    %v316 = vpop.f32.mrf.mxu0
    %v317 = vadd.f32 %v258, %v316
    %v318 = vpop.f32.mrf.mxu0
    %v319 = vadd.f32 %v258, %v318
    %320 = vdwg.mxu0
    %v321 = vmax.f32 %v317, 0.0
    %v322 = vmax.f32 %v319, 0.0
    %v323 = vpack.c.bf16 %v322, %v321
    %s324 = scalar_lea.vmem [#allocation6], 192
    %v325 = vld [vmem:[%s324] sm:$0xf]
    %v326 = vld [vmem:[%s324 + $0x4] sm:$0xf]
    %v327 = vld [vmem:[%s324 + $0x8] sm:$0xf]
    %v328 = vld [vmem:[%s324 + $0xc] sm:$0xf]
    %v329 = vld [vmem:[%s324 + $0x10] sm:$0xf]
    %v330 = vld [vmem:[%s324 + $0x14] sm:$0xf]
    %v331 = vld [vmem:[%s324 + $0x18] sm:$0xf]
    %v332 = vld [vmem:[%s324 + $0x1c] sm:$0xf]
    %v333 = vld [vmem:[%s324 + $0x20] sm:$0xf]
    %v334 = vld [vmem:[%s324 + $0x24] sm:$0xf]
    %v335 = vld [vmem:[%s324 + $0x28] sm:$0xf]
    %v336 = vld [vmem:[%s324 + $0x2c] sm:$0xf]
    %v337 = vld [vmem:[%s324 + $0x30] sm:$0xf]
    %v338 = vld [vmem:[%s324 + $0x34] sm:$0xf]
    %v339 = vld [vmem:[%s324 + $0x38] sm:$0xf]
    %v340 = vld [vmem:[%s324 + $0x3c] sm:$0xf]
    %v341 = vld [vmem:[#allocation8 + $0x3] sm:$0x1]
    %v342 = vperm.slane %v341, 0
    %v359 = vunpack.c.l.b16 %v325
    %v360 = vunpack.c.l.b16 %v326
    %v361 = vunpack.c.l.b16 %v327
    %v362 = vunpack.c.l.b16 %v328
    %v363 = vunpack.c.l.b16 %v329
    %v364 = vunpack.c.l.b16 %v330
    %v365 = vunpack.c.l.b16 %v331
    %v366 = vunpack.c.l.b16 %v332
    %v367 = vunpack.c.l.b16 %v333
    %v368 = vunpack.c.l.b16 %v334
    %v369 = vunpack.c.l.b16 %v335
    %v370 = vunpack.c.l.b16 %v336
    %v371 = vunpack.c.l.b16 %v337
    %v372 = vunpack.c.l.b16 %v338
    %v373 = vunpack.c.l.b16 %v339
    %v374 = vunpack.c.l.b16 %v340
    %v375 = vpack.c.b16 %v360, %v359
    %v376 = vpack.c.b16 %v362, %v361
    %v377 = vpack.c.b16 %v364, %v363
    %v378 = vpack.c.b16 %v366, %v365
    %v379 = vpack.c.b16 %v368, %v367
    %v380 = vpack.c.b16 %v370, %v369
    %v381 = vpack.c.b16 %v372, %v371
    %v382 = vpack.c.b16 %v374, %v373
    %391 = vmatpush.bf16.msra.mxu0 %v382
    %392 = vmatpush.bf16.msra.mxu0 %v381
    %393 = vmatpush.bf16.msra.mxu0 %v380
    %394 = vmatpush.bf16.msra.mxu0 %v379
    %395 = vmatpush.bf16.msra.mxu0 %v378
    %396 = vmatpush.bf16.msra.mxu0 %v377
    %397 = vmatpush.bf16.msra.mxu0 %v376
    %398 = vmatpush.bf16.msra.mxu0 %v375
    %399 = vmatmul.bf16.gmra.mxu0 %v323
    %v400 = vpop.f32.mrf.mxu0
    %v401 = vadd.f32 %v342, %v400
    %v402 = vpop.f32.mrf.mxu0
    %v403 = vadd.f32 %v342, %v402
    %404 = vdwg.mxu0
    %v405 = vadd.f32 %v401, %v237
    %v406 = vadd.f32 %v403, %v238
    %v407 = vmax.f32 %v405, 0.0
    %v408 = vmax.f32 %v406, 0.0
    %409 = vst [vmem:[#allocation2] sm:$0xff] %v407
    %410 = vst [vmem:[#allocation2 + $0x8] sm:$0xff] %v408
    %v411 = vld [vmem:[#allocation2] sm:$0xff]
    %v412 = vld [vmem:[#allocation2 + $0x8] sm:$0xff]
    %v413 = vpack.c.bf16 %v412, %v411
    %s414 = scalar_lea.vmem [#allocation6], 256
    %v415 = vld [vmem:[%s414] sm:$0xf]
    %v416 = vld [vmem:[%s414 + $0x4] sm:$0xf]
    %v417 = vld [vmem:[%s414 + $0x8] sm:$0xf]
    %v418 = vld [vmem:[%s414 + $0xc] sm:$0xf]
    %v419 = vld [vmem:[%s414 + $0x10] sm:$0xf]
    %v420 = vld [vmem:[%s414 + $0x14] sm:$0xf]
    %v421 = vld [vmem:[%s414 + $0x18] sm:$0xf]
    %v422 = vld [vmem:[%s414 + $0x1c] sm:$0xf]
    %v423 = vld [vmem:[%s414 + $0x20] sm:$0xf]
    %v424 = vld [vmem:[%s414 + $0x24] sm:$0xf]
    %v425 = vld [vmem:[%s414 + $0x28] sm:$0xf]
    %v426 = vld [vmem:[%s414 + $0x2c] sm:$0xf]
    %v427 = vld [vmem:[%s414 + $0x30] sm:$0xf]
    %v428 = vld [vmem:[%s414 + $0x34] sm:$0xf]
    %v429 = vld [vmem:[%s414 + $0x38] sm:$0xf]
    %v430 = vld [vmem:[%s414 + $0x3c] sm:$0xf]
    %v431 = vld [vmem:[#allocation8 + $0x4] sm:$0x1]
    %v432 = vperm.slane %v431, 0
    %v449 = vunpack.c.l.b16 %v415
    %v450 = vunpack.c.l.b16 %v416
    %v451 = vunpack.c.l.b16 %v417
    %v452 = vunpack.c.l.b16 %v418
    %v453 = vunpack.c.l.b16 %v419
    %v454 = vunpack.c.l.b16 %v420
    %v455 = vunpack.c.l.b16 %v421
    %v456 = vunpack.c.l.b16 %v422
    %v457 = vunpack.c.l.b16 %v423
    %v458 = vunpack.c.l.b16 %v424
    %v459 = vunpack.c.l.b16 %v425
    %v460 = vunpack.c.l.b16 %v426
    %v461 = vunpack.c.l.b16 %v427
    %v462 = vunpack.c.l.b16 %v428
    %v463 = vunpack.c.l.b16 %v429
    %v464 = vunpack.c.l.b16 %v430
    %v465 = vpack.c.b16 %v450, %v449
    %v466 = vpack.c.b16 %v452, %v451
    %v467 = vpack.c.b16 %v454, %v453
    %v468 = vpack.c.b16 %v456, %v455
    %v469 = vpack.c.b16 %v458, %v457
    %v470 = vpack.c.b16 %v460, %v459
    %v471 = vpack.c.b16 %v462, %v461
    %v472 = vpack.c.b16 %v464, %v463
    %481 = vmatpush.bf16.msra.mxu0 %v472
    %482 = vmatpush.bf16.msra.mxu0 %v471
    %483 = vmatpush.bf16.msra.mxu0 %v470
    %484 = vmatpush.bf16.msra.mxu0 %v469
    %485 = vmatpush.bf16.msra.mxu0 %v468
    %486 = vmatpush.bf16.msra.mxu0 %v467
    %487 = vmatpush.bf16.msra.mxu0 %v466
    %488 = vmatpush.bf16.msra.mxu0 %v465
    %489 = vmatmul.bf16.gmra.mxu0 %v413
    %v490 = vpop.f32.mrf.mxu0
    %v491 = vadd.f32 %v432, %v490
    %v492 = vpop.f32.mrf.mxu0
    %v493 = vadd.f32 %v432, %v492
    %494 = vdwg.mxu0
    %495 = vst [vmem:[#allocation9] sm:$0xff] %v491
    %496 = vst [vmem:[#allocation9 + $0x8] sm:$0xff] %v493
    // Predicated region
    $region26: #{tpu_custom_call.1} parent=1 // pred_check
      _
    $region27: #{tpu_custom_call.1} parent=1 // pred_check_branch
      %498 = sbr.rel (0) target = $region29
    $region28: #{tpu_custom_call.1} parent=1 // pred_region
      %500 = vsyncadd [#allocation5], 0
      %s501 = sshll.u32 [#allocation9], 4
      %s502 = int_to_ptr.vmem [resolvable:$true] %s501
      %s503 = sshll.u32 %s3, 4
      %s504 = int_to_ptr.hbm [resolvable:$true] %s503
      %509 = dma.vmem_to_hbm [thread:$0]  %s502, 256, %s504, [#allocation5], 128, 128, 8
    $region29: #{tpu_custom_call.1} parent=1 // pred_fallthru
      _
    // Predicated region
    $region30: #{tpu_custom_call.1} parent=1 // pred_check
      _
    $region31: #{tpu_custom_call.1} parent=1 // pred_check_branch
      %511 = sbr.rel (0) target = $region33
    $region32: #{tpu_custom_call.1} parent=1 // pred_region
      %513 = dma.done [#allocation5], 256
    $region33: #{tpu_custom_call.1} parent=1 // pred_fallthru
      _
    %514 = vsyncpa [#allocation4], 1
    %515 = vsyncpa [#allocation7], 1
    %516 = vsyncpa [#allocation5], 1

</llo_original>
